<compile_context>
chip_gen: v7x
topology: tpu7x:2x2x1
jax: 0.10.0
libtpu: 0.0.40
codegen_flags: <defaults>
</compile_context>

<pallas_src>
import jax
import jax.numpy as jnp
from jax.experimental import pallas as pl
from jax.experimental.pallas import tpu as pltpu


def _round_up(n, m):
    return ((n + m - 1) // m) * m


def _choose_tm(B):
    """Batch tile: >=2 grid steps (v7x has two TensorCores) while amortizing the
    ~0.35us per-grid-step overhead. Must be a multiple of 8 (sublane)."""
    tm = _round_up(max(pl.cdiv(B, 2), 1), 8)
    return max(8, min(tm, 2048))


def vnet_kernel(x_ref, w1_ref, b1_ref, w2_ref, b2_ref, w3_ref, b3_ref, o_ref):
    # x tile: (TM, in_dim) f32; hidden padded to 128 lanes; output is narrow (out_dim).
    x = x_ref[...]            # (TM, K) f32
    w1 = w1_ref[...]          # (K, HP) f32
    in_dim = x.shape[1]

    # Layer 1: K is tiny (4) -> K broadcast-FMAs on the VPU instead of a
    # 4/128-utilized MXU matmul. Bias broadcasts from (1, HP).
    h = b1_ref[...]
    for k in range(in_dim):
        h = h + x[:, k:k + 1] * w1[k:k + 1, :]
    h = jnp.tanh(h)

    # Layer 2: MXU matmul, f32 operands, f32 accumulation.
    h = jnp.dot(h, w2_ref[...], preferred_element_type=jnp.float32) + b2_ref[...]
    h = jnp.tanh(h)

    # Layer 3: narrow-N MXU matmul straight to (TM, out_dim), f32.
    out = jnp.dot(h, w3_ref[...], preferred_element_type=jnp.float32) + b3_ref[...]

    # Sigmoid epilogue (EUP transcendental path).
    o_ref[...] = jax.nn.sigmoid(out).astype(o_ref.dtype)


def prepare_vnet_params(params, lane=128):
    """One-time prep (NOT on the hot path): lane-pad hidden dim to 128, keep f32.

    Zero padding keeps the real columns exact: padded hidden lanes stay tanh(0)=0
    and contribute nothing through zero-padded weight rows.
    """
    w1, b1 = params["w1"], params["b1"]
    w2, b2 = params["w2"], params["b2"]
    w3, b3 = params["w3"], params["b3"]

    in_dim, h_dim = w1.shape
    out_dim = w3.shape[1]
    HP = _round_up(h_dim, lane)

    w1p = jnp.zeros((in_dim, HP), jnp.float32).at[:, :h_dim].set(w1.astype(jnp.float32))
    b1p = jnp.zeros((1, HP), jnp.float32).at[:, :h_dim].set(b1.reshape(1, -1).astype(jnp.float32))
    w2p = jnp.zeros((HP, HP), jnp.float32).at[:h_dim, :h_dim].set(w2.astype(jnp.float32))
    b2p = jnp.zeros((1, HP), jnp.float32).at[:, :h_dim].set(b2.reshape(1, -1).astype(jnp.float32))
    w3p = jnp.zeros((HP, out_dim), jnp.float32).at[:h_dim, :].set(w3.astype(jnp.float32))
    b3p = b3.reshape(1, -1).astype(jnp.float32)

    return {"w1": w1p, "b1": b1p, "w2": w2p, "b2": b2p, "w3": w3p, "b3": b3p}


@jax.jit
def vnet_forward(x, prepped):
    """x: [B, in_dim] float32.  prepped: output of prepare_vnet_params."""
    w1p, b1p = prepped["w1"], prepped["b1"]
    w2p, b2p = prepped["w2"], prepped["b2"]
    w3p, b3p = prepped["w3"], prepped["b3"]

    in_dim = w1p.shape[0]
    out_dim = w3p.shape[1]

    x = x.astype(jnp.float32)
    B = x.shape[0]

    tm = _choose_tm(B)
    B_pad = _round_up(B, tm)
    if B_pad != B:
        xp = jnp.zeros((B_pad, in_dim), jnp.float32).at[:B].set(x)
    else:
        xp = x  # no pad copy in the common case

    grid = (B_pad // tm,)
    pinned = lambda shape: pl.BlockSpec(shape, lambda i: (0, 0))

    out = pl.pallas_call(
        vnet_kernel,
        out_shape=jax.ShapeDtypeStruct((B_pad, out_dim), jnp.float32),
        grid=grid,
        in_specs=[
            pl.BlockSpec((tm, in_dim), lambda i: (i, 0)),   # x tile moves with grid
            pinned(w1p.shape), pinned(b1p.shape),           # weights resident in VMEM
            pinned(w2p.shape), pinned(b2p.shape),
            pinned(w3p.shape), pinned(b3p.shape),
        ],
        out_specs=pl.BlockSpec((tm, out_dim), lambda i: (i, 0)),
        compiler_params=pltpu.CompilerParams(
            dimension_semantics=("parallel",)),
    )(xp, w1p, b1p, w2p, b2p, w3p, b3p)

    return out if B_pad == B else out[:B]


def init_vnet_params(key, in_dim, h_dim, out_dim):
    """Deterministic init. Weights stored as [in, out] (transposed vs PyTorch)."""
    ks = jax.random.split(key, 6)

    def linear(kw, kb, fan_in, fan_out):
        # PyTorch nn.Linear default init: U(-1/sqrt(fan_in), 1/sqrt(fan_in))
        bound = 1.0 / jnp.sqrt(fan_in)
        w = jax.random.uniform(kw, (fan_in, fan_out), jnp.float32, -bound, bound)
        b = jax.random.uniform(kb, (1, fan_out), jnp.float32, -bound, bound)
        return w, b

    w1, b1 = linear(ks[0], ks[1], in_dim, h_dim)
    w2, b2 = linear(ks[2], ks[3], h_dim, h_dim)
    w3, b3 = linear(ks[4], ks[5], h_dim, out_dim)
    return {"w1": w1, "b1": b1, "w2": w2, "b2": b2, "w3": w3, "b3": b3}


def vnet_reference(x, params):
    """Pure-JAX f32 reference for correctness checking."""
    h = jnp.tanh(x @ params["w1"] + params["b1"])
    h = jnp.tanh(h @ params["w2"] + params["b2"])
    h = h @ params["w3"] + params["b3"]
    return jax.nn.sigmoid(h)


if __name__ == "__main__":
    in_dim, h_dim, out_dim = 4, 32, 2
    batch = 256  # tm=128 -> 2 grid steps: exercises pipelining / v7x megacore sharding

    key = jax.random.PRNGKey(0)
    k_params, k_x = jax.random.split(key)

    params = init_vnet_params(k_params, in_dim, h_dim, out_dim)
    prepped = prepare_vnet_params(params)            # one-time, off the hot path
    prepped = jax.tree_util.tree_map(jax.block_until_ready, prepped)

    x = jax.random.normal(k_x, (batch, in_dim), dtype=jnp.float32)

    out = vnet_forward(x, prepped)
    out = jax.block_until_ready(out)

    ref = vnet_reference(x, params)
    assert out.shape == (batch, out_dim)
    # All-f32 path (no bf16 weight cast) -> tight tolerance.
    assert jnp.allclose(out, ref, atol=2e-3, rtol=2e-3), "Pallas output mismatch vs reference"

    print("KERNEL_OK")
</pallas_src>

<mosaic_0001>
module attributes {stable_mosaic.version = 11 : i64} {
  func.func @vnet_kernel(%arg0: i32, %arg1: memref<128x4xf32, #tpu.memory_space<vmem>>, %arg2: memref<4x128xf32, #tpu.memory_space<vmem>>, %arg3: memref<1x128xf32, #tpu.memory_space<vmem>>, %arg4: memref<128x128xf32, #tpu.memory_space<vmem>>, %arg5: memref<1x128xf32, #tpu.memory_space<vmem>>, %arg6: memref<128x2xf32, #tpu.memory_space<vmem>>, %arg7: memref<1x2xf32, #tpu.memory_space<vmem>>, %arg8: memref<128x2xf32, #tpu.memory_space<vmem>>) attributes {dimension_semantics = [#tpu.dimension_semantics<parallel>], iteration_bounds = array<i64: 2>, scalar_prefetch = 0 : i64, scratch_operands = 0 : i64, tpu.core_type = #tpu.core_type<tc>, window_params = [{transform_indices = @transform_0, window_bounds = array<i64: 128, 4>}, {pipeline_mode = #tpu.pipeline_mode<synchronous>, transform_indices = @transform_1, window_bounds = array<i64: 4, 128>}, {pipeline_mode = #tpu.pipeline_mode<synchronous>, transform_indices = @transform_2, window_bounds = array<i64: 1, 128>}, {pipeline_mode = #tpu.pipeline_mode<synchronous>, transform_indices = @transform_3, window_bounds = array<i64: 128, 128>}, {pipeline_mode = #tpu.pipeline_mode<synchronous>, transform_indices = @transform_4, window_bounds = array<i64: 1, 128>}, {pipeline_mode = #tpu.pipeline_mode<synchronous>, transform_indices = @transform_5, window_bounds = array<i64: 128, 2>}, {pipeline_mode = #tpu.pipeline_mode<synchronous>, transform_indices = @transform_6, window_bounds = array<i64: 1, 2>}, {transform_indices = @transform_7, window_bounds = array<i64: 128, 2>}]} {
    %c0 = arith.constant 0 : index
    %c0_0 = arith.constant 0 : index
    %0 = vector.load %arg1[%c0, %c0_0] : memref<128x4xf32, #tpu.memory_space<vmem>>, vector<128x4xf32>
    %c0_1 = arith.constant 0 : index
    %c0_2 = arith.constant 0 : index
    %1 = vector.load %arg2[%c0_1, %c0_2] : memref<4x128xf32, #tpu.memory_space<vmem>>, vector<4x128xf32>
    %c0_3 = arith.constant 0 : index
    %c0_4 = arith.constant 0 : index
    %2 = vector.load %arg3[%c0_3, %c0_4] : memref<1x128xf32, #tpu.memory_space<vmem>>, vector<1x128xf32>
    %3 = vector.extract_strided_slice %0 {offsets = [0, 0], sizes = [128, 1], strides = [1, 1]} : vector<128x4xf32> to vector<128x1xf32>
    %4 = vector.extract_strided_slice %1 {offsets = [0, 0], sizes = [1, 128], strides = [1, 1]} : vector<4x128xf32> to vector<1x128xf32>
    %5 = vector.broadcast %3 : vector<128x1xf32> to vector<128x128xf32>
    %6 = vector.broadcast %4 : vector<1x128xf32> to vector<128x128xf32>
    %7 = arith.mulf %5, %6 : vector<128x128xf32>
    %8 = vector.broadcast %2 : vector<1x128xf32> to vector<128x128xf32>
    %9 = arith.addf %8, %7 : vector<128x128xf32>
    %10 = vector.extract_strided_slice %0 {offsets = [0, 1], sizes = [128, 1], strides = [1, 1]} : vector<128x4xf32> to vector<128x1xf32>
    %11 = vector.extract_strided_slice %1 {offsets = [1, 0], sizes = [1, 128], strides = [1, 1]} : vector<4x128xf32> to vector<1x128xf32>
    %12 = vector.broadcast %10 : vector<128x1xf32> to vector<128x128xf32>
    %13 = vector.broadcast %11 : vector<1x128xf32> to vector<128x128xf32>
    %14 = arith.mulf %12, %13 : vector<128x128xf32>
    %15 = arith.addf %9, %14 : vector<128x128xf32>
    %16 = vector.extract_strided_slice %0 {offsets = [0, 2], sizes = [128, 1], strides = [1, 1]} : vector<128x4xf32> to vector<128x1xf32>
    %17 = vector.extract_strided_slice %1 {offsets = [2, 0], sizes = [1, 128], strides = [1, 1]} : vector<4x128xf32> to vector<1x128xf32>
    %18 = vector.broadcast %16 : vector<128x1xf32> to vector<128x128xf32>
    %19 = vector.broadcast %17 : vector<1x128xf32> to vector<128x128xf32>
    %20 = arith.mulf %18, %19 : vector<128x128xf32>
    %21 = arith.addf %15, %20 : vector<128x128xf32>
    %22 = vector.extract_strided_slice %0 {offsets = [0, 3], sizes = [128, 1], strides = [1, 1]} : vector<128x4xf32> to vector<128x1xf32>
    %23 = vector.extract_strided_slice %1 {offsets = [3, 0], sizes = [1, 128], strides = [1, 1]} : vector<4x128xf32> to vector<1x128xf32>
    %24 = vector.broadcast %22 : vector<128x1xf32> to vector<128x128xf32>
    %25 = vector.broadcast %23 : vector<1x128xf32> to vector<128x128xf32>
    %26 = arith.mulf %24, %25 : vector<128x128xf32>
    %27 = arith.addf %21, %26 : vector<128x128xf32>
    %28 = math.tanh %27 : vector<128x128xf32>
    %c0_5 = arith.constant 0 : index
    %c0_6 = arith.constant 0 : index
    %29 = vector.load %arg4[%c0_5, %c0_6] : memref<128x128xf32, #tpu.memory_space<vmem>>, vector<128x128xf32>
    %cst = arith.constant dense<0.000000e+00> : vector<128x128xf32>
    %30 = tpu.matmul %28, %29, %cst {dimension_numbers = #tpu.dot_dimension_numbers<[1], [0], [0], [1], [0, 0, 1, 1], [], []>} : vector<128x128xf32>, vector<128x128xf32>, vector<128x128xf32> -> vector<128x128xf32>
    %c0_7 = arith.constant 0 : index
    %c0_8 = arith.constant 0 : index
    %31 = vector.load %arg5[%c0_7, %c0_8] : memref<1x128xf32, #tpu.memory_space<vmem>>, vector<1x128xf32>
    %32 = vector.broadcast %31 : vector<1x128xf32> to vector<128x128xf32>
    %33 = arith.addf %30, %32 : vector<128x128xf32>
    %34 = math.tanh %33 : vector<128x128xf32>
    %c0_9 = arith.constant 0 : index
    %c0_10 = arith.constant 0 : index
    %35 = vector.load %arg6[%c0_9, %c0_10] : memref<128x2xf32, #tpu.memory_space<vmem>>, vector<128x2xf32>
    %cst_11 = arith.constant dense<0.000000e+00> : vector<128x2xf32>
    %36 = tpu.matmul %34, %35, %cst_11 {dimension_numbers = #tpu.dot_dimension_numbers<[1], [0], [0], [1], [0, 0, 1, 1], [], []>} : vector<128x128xf32>, vector<128x2xf32>, vector<128x2xf32> -> vector<128x2xf32>
    %c0_12 = arith.constant 0 : index
    %c0_13 = arith.constant 0 : index
    %37 = vector.load %arg7[%c0_12, %c0_13] : memref<1x2xf32, #tpu.memory_space<vmem>>, vector<1x2xf32>
    %38 = vector.broadcast %37 : vector<1x2xf32> to vector<128x2xf32>
    %39 = arith.addf %36, %38 : vector<128x2xf32>
    %40 = arith.negf %39 : vector<128x2xf32>
    %41 = math.exp %40 : vector<128x2xf32>
    %cst_14 = arith.constant 1.000000e+00 : f32
    %42 = vector.broadcast %cst_14 : f32 to vector<128x2xf32>
    %43 = arith.addf %42, %41 : vector<128x2xf32>
    %44 = arith.divf %42, %43 : vector<128x2xf32>
    %c0_15 = arith.constant 0 : index
    %c0_16 = arith.constant 0 : index
    %45 = vector.load %arg8[%c0_15, %c0_16] : memref<128x2xf32, #tpu.memory_space<vmem>>, vector<128x2xf32>
    tpu.vector_store %arg8[%c0_15, %c0_16], %44 {strides = array<i32>} : memref<128x2xf32, #tpu.memory_space<vmem>>, vector<128x2xf32>,
    return
  }
  func.func @transform_0(%arg0: i32) -> (i32, i32) {
    %c0_i32 = arith.constant 0 : i32
    %c0_i32_0 = arith.constant 0 : i32
    return %arg0, %c0_i32 : i32, i32
  }
  func.func @transform_1(%arg0: i32) -> (i32, i32) {
    %c0_i32 = arith.constant 0 : i32
    %c0_i32_0 = arith.constant 0 : i32
    %c0_i32_1 = arith.constant 0 : i32
    return %c0_i32, %c0_i32_0 : i32, i32
  }
  func.func @transform_2(%arg0: i32) -> (i32, i32) {
    %c0_i32 = arith.constant 0 : i32
    %c0_i32_0 = arith.constant 0 : i32
    %c0_i32_1 = arith.constant 0 : i32
    return %c0_i32, %c0_i32_0 : i32, i32
  }
  func.func @transform_3(%arg0: i32) -> (i32, i32) {
    %c0_i32 = arith.constant 0 : i32
    %c0_i32_0 = arith.constant 0 : i32
    %c0_i32_1 = arith.constant 0 : i32
    return %c0_i32, %c0_i32_0 : i32, i32
  }
  func.func @transform_4(%arg0: i32) -> (i32, i32) {
    %c0_i32 = arith.constant 0 : i32
    %c0_i32_0 = arith.constant 0 : i32
    %c0_i32_1 = arith.constant 0 : i32
    return %c0_i32, %c0_i32_0 : i32, i32
  }
  func.func @transform_5(%arg0: i32) -> (i32, i32) {
    %c0_i32 = arith.constant 0 : i32
    %c0_i32_0 = arith.constant 0 : i32
    %c0_i32_1 = arith.constant 0 : i32
    return %c0_i32, %c0_i32_0 : i32, i32
  }
  func.func @transform_6(%arg0: i32) -> (i32, i32) {
    %c0_i32 = arith.constant 0 : i32
    %c0_i32_0 = arith.constant 0 : i32
    %c0_i32_1 = arith.constant 0 : i32
    return %c0_i32, %c0_i32_0 : i32, i32
  }
  func.func @transform_7(%arg0: i32) -> (i32, i32) {
    %c0_i32 = arith.constant 0 : i32
    %c0_i32_0 = arith.constant 0 : i32
    return %arg0, %c0_i32 : i32, i32
  }
}

</mosaic_0001>

<llo_original>
// kernel: vnet_forward.1
$region0: #{vnet_forward.1}
  #allocation0 [shape = 'u32[]', space=smem, size = 0x4, offset = 0x4, fixed_abs, tag = 'smem constant byte address 0x4 - core index']
  #allocation1 [shape = 'u32[144,128]{1,0:T(1,128)}', space=vmem, size = 0x12000, scoped, tag = 'internal scratch']
  %s0 = inlined_call_operand.vmem [shape: f32[256,4], index: 0, kind: input, shape index: {}]
  %s1 = inlined_call_operand.vmem [shape: f32[4,128], index: 1, kind: input, shape index: {}]
  %s2 = inlined_call_operand.vmem [shape: f32[1,128], index: 2, kind: input, shape index: {}]
  %s3 = inlined_call_operand.vmem [shape: f32[128,128], index: 3, kind: input, shape index: {}]
  %s4 = inlined_call_operand.vmem [shape: f32[1,128], index: 4, kind: input, shape index: {}]
  %s5 = inlined_call_operand.vmem [shape: f32[128,2], index: 5, kind: input, shape index: {}]
  %s6 = inlined_call_operand.vmem [shape: f32[1,2], index: 6, kind: input, shape index: {}]
  %s7 = inlined_call_operand.vmem [shape: f32[256,2], index: 7, kind: output, shape index: {}]
  %s8 = sld [smem:[#allocation0]]
  $region61: #{vnet_forward.1} parent=0
    _
  %s10 = ssub.s32 1, %s8
  %s11 = scalar_select 0, %s10, %s8
  loop: start=0, step=1, limit=4
  $region2: #{vnet_forward.1} parent=0 // loop_pre_header
    _
  $region3: #{vnet_forward.1} parent=0 // loop_header
    %s13 = sphi 0, %s17
    %p14 = scmp.ge.s32.totalorder %s13, 4
    %s23 = sphi 0, %s25
    %s26 = sphi 0, %s23
    %s27 = sphi 0, %s26
    %s43 = sphi 0, %s27
    %s47 = sphi 0, %s47
    %s49 = sphi 0, %s47
    %s50 = sphi 0, %s49
    %s64 = sphi 0, %s50
    %s68 = sphi 0, %s68
    %s70 = sphi 0, %s68
    %s71 = sphi 0, %s70
    %s85 = sphi 0, %s71
    %s89 = sphi 0, %s89
    %s91 = sphi 0, %s89
    %s92 = sphi 0, %s91
    %s106 = sphi 0, %s92
    %s110 = sphi 0, %s110
    %s112 = sphi 0, %s110
    %s113 = sphi 0, %s112
    %s127 = sphi 0, %s113
    %s131 = sphi 0, %s131
    %s133 = sphi 0, %s131
    %s134 = sphi 0, %s133
    %s148 = sphi 0, %s134
    %s152 = sphi 0, %s152
    %s154 = sphi 0, %s152
    %s155 = sphi 0, %s154
    %s169 = sphi 0, %s155
    %s175 = sphi 0, %s177
    %s178 = sphi 0, %s175
    %s179 = sphi 0, %s178
    %s195 = sphi 0, %s179
  $region4: #{vnet_forward.1} parent=0 // loop_header_branch
    %16 = sbr.rel (%p14) target = $region8
  $region5: #{vnet_forward.1} parent=0 // loop_body
    %s18 = ssub.s32 %s13, 1
    %s19 = ssub.s32 %s13, 2
    %s20 = sadd.s32 %s13, 1
    %s21 = ssub.s32 %s13, %s20
    %p22 = scmp.eq.s32.totalorder %s21, 0
    %s24 = sadd.s32 %s23, 1
    %s25 = scalar_select %p22, %s23, %s24
    %p28 = pneg %p22
    %p29 = scmp.eq.s32.totalorder %s13, 1
    %p30 = por %p28, %p29
    %p31 = scmp.ne.s32.totalorder %s23, %s26
    %p32 = scmp.eq.s32.totalorder %s13, 0
    %p33 = por %p31, %p32
    %p34 = scmp.ne.s32.totalorder %s23, %s26
    %p35 = scmp.eq.s32.totalorder %s18, 1
    %p36 = por %p34, %p35
    %p37 = scmp.ne.s32.totalorder %s26, %s27
    %p38 = scmp.eq.s32.totalorder %s18, 0
    %p39 = por %p37, %p38
    %p40 = scmp.ne.s32.totalorder %s26, %s27
    %p41 = scmp.eq.s32.totalorder %s19, 1
    %p42 = por %p40, %p41
    %p44 = scmp.ne.s32.totalorder %s27, %s43
    %p45 = scmp.eq.s32.totalorder %s19, 0
    %p46 = por %p44, %p45
    %s48 = sadd.s32 %s47, 1
    %p51 = scmp.eq.s32.totalorder %s13, 1
    %p52 = scmp.ne.s32.totalorder %s47, %s49
    %p53 = scmp.eq.s32.totalorder %s13, 0
    %p54 = por %p52, %p53
    %p55 = scmp.ne.s32.totalorder %s47, %s49
    %p56 = scmp.eq.s32.totalorder %s18, 1
    %p57 = por %p55, %p56
    %p58 = scmp.ne.s32.totalorder %s49, %s50
    %p59 = scmp.eq.s32.totalorder %s18, 0
    %p60 = por %p58, %p59
    %p61 = scmp.ne.s32.totalorder %s49, %s50
    %p62 = scmp.eq.s32.totalorder %s19, 1
    %p63 = por %p61, %p62
    %p65 = scmp.ne.s32.totalorder %s50, %s64
    %p66 = scmp.eq.s32.totalorder %s19, 0
    %p67 = por %p65, %p66
    %s69 = sadd.s32 %s68, 1
    %p72 = scmp.eq.s32.totalorder %s13, 1
    %p73 = scmp.ne.s32.totalorder %s68, %s70
    %p74 = scmp.eq.s32.totalorder %s13, 0
    %p75 = por %p73, %p74
    %p76 = scmp.ne.s32.totalorder %s68, %s70
    %p77 = scmp.eq.s32.totalorder %s18, 1
    %p78 = por %p76, %p77
    %p79 = scmp.ne.s32.totalorder %s70, %s71
    %p80 = scmp.eq.s32.totalorder %s18, 0
    %p81 = por %p79, %p80
    %p82 = scmp.ne.s32.totalorder %s70, %s71
    %p83 = scmp.eq.s32.totalorder %s19, 1
    %p84 = por %p82, %p83
    %p86 = scmp.ne.s32.totalorder %s71, %s85
    %p87 = scmp.eq.s32.totalorder %s19, 0
    %p88 = por %p86, %p87
    %s90 = sadd.s32 %s89, 1
    %p93 = scmp.eq.s32.totalorder %s13, 1
    %p94 = scmp.ne.s32.totalorder %s89, %s91
    %p95 = scmp.eq.s32.totalorder %s13, 0
    %p96 = por %p94, %p95
    %p97 = scmp.ne.s32.totalorder %s89, %s91
    %p98 = scmp.eq.s32.totalorder %s18, 1
    %p99 = por %p97, %p98
    %p100 = scmp.ne.s32.totalorder %s91, %s92
    %p101 = scmp.eq.s32.totalorder %s18, 0
    %p102 = por %p100, %p101
    %p103 = scmp.ne.s32.totalorder %s91, %s92
    %p104 = scmp.eq.s32.totalorder %s19, 1
    %p105 = por %p103, %p104
    %p107 = scmp.ne.s32.totalorder %s92, %s106
    %p108 = scmp.eq.s32.totalorder %s19, 0
    %p109 = por %p107, %p108
    %s111 = sadd.s32 %s110, 1
    %p114 = scmp.eq.s32.totalorder %s13, 1
    %p115 = scmp.ne.s32.totalorder %s110, %s112
    %p116 = scmp.eq.s32.totalorder %s13, 0
    %p117 = por %p115, %p116
    %p118 = scmp.ne.s32.totalorder %s110, %s112
    %p119 = scmp.eq.s32.totalorder %s18, 1
    %p120 = por %p118, %p119
    %p121 = scmp.ne.s32.totalorder %s112, %s113
    %p122 = scmp.eq.s32.totalorder %s18, 0
    %p123 = por %p121, %p122
    %p124 = scmp.ne.s32.totalorder %s112, %s113
    %p125 = scmp.eq.s32.totalorder %s19, 1
    %p126 = por %p124, %p125
    %p128 = scmp.ne.s32.totalorder %s113, %s127
    %p129 = scmp.eq.s32.totalorder %s19, 0
    %p130 = por %p128, %p129
    %s132 = sadd.s32 %s131, 1
    %p135 = scmp.eq.s32.totalorder %s13, 1
    %p136 = scmp.ne.s32.totalorder %s131, %s133
    %p137 = scmp.eq.s32.totalorder %s13, 0
    %p138 = por %p136, %p137
    %p139 = scmp.ne.s32.totalorder %s131, %s133
    %p140 = scmp.eq.s32.totalorder %s18, 1
    %p141 = por %p139, %p140
    %p142 = scmp.ne.s32.totalorder %s133, %s134
    %p143 = scmp.eq.s32.totalorder %s18, 0
    %p144 = por %p142, %p143
    %p145 = scmp.ne.s32.totalorder %s133, %s134
    %p146 = scmp.eq.s32.totalorder %s19, 1
    %p147 = por %p145, %p146
    %p149 = scmp.ne.s32.totalorder %s134, %s148
    %p150 = scmp.eq.s32.totalorder %s19, 0
    %p151 = por %p149, %p150
    %s153 = sadd.s32 %s152, 1
    %p156 = scmp.eq.s32.totalorder %s13, 1
    %p157 = scmp.ne.s32.totalorder %s152, %s154
    %p158 = scmp.eq.s32.totalorder %s13, 0
    %p159 = por %p157, %p158
    %p160 = scmp.ne.s32.totalorder %s152, %s154
    %p161 = scmp.eq.s32.totalorder %s18, 1
    %p162 = por %p160, %p161
    %p163 = scmp.ne.s32.totalorder %s154, %s155
    %p164 = scmp.eq.s32.totalorder %s18, 0
    %p165 = por %p163, %p164
    %p166 = scmp.ne.s32.totalorder %s154, %s155
    %p167 = scmp.eq.s32.totalorder %s19, 1
    %p168 = por %p166, %p167
    %p170 = scmp.ne.s32.totalorder %s155, %s169
    %p171 = scmp.eq.s32.totalorder %s19, 0
    %p172 = por %p170, %p171
    %s173 = ssub.s32 %s13, %s20
    %p174 = scmp.eq.s32.totalorder %s173, 0
    %s176 = sadd.s32 %s175, 1
    %s177 = scalar_select %p174, %s175, %s176
    %p180 = pneg %p174
    %p181 = scmp.eq.s32.totalorder %s13, 1
    %p182 = por %p180, %p181
    %p183 = scmp.ne.s32.totalorder %s175, %s178
    %p184 = scmp.eq.s32.totalorder %s13, 0
    %p185 = por %p183, %p184
    %p186 = scmp.ne.s32.totalorder %s175, %s178
    %p187 = scmp.eq.s32.totalorder %s18, 1
    %p188 = por %p186, %p187
    %p189 = scmp.ne.s32.totalorder %s178, %s179
    %p190 = scmp.eq.s32.totalorder %s18, 0
    %p191 = por %p189, %p190
    %p192 = scmp.ne.s32.totalorder %s178, %s179
    %p193 = scmp.eq.s32.totalorder %s19, 1
    %p194 = por %p192, %p193
    %p196 = scmp.ne.s32.totalorder %s179, %s195
    %p197 = scmp.eq.s32.totalorder %s19, 0
    %p198 = por %p196, %p197
    %p199 = scmp.le.s32.totalorder 1, %s13
    %p200 = scmp.lt.s32.totalorder %s13, 3
    %p201 = pnand %p199, %p200
    %p202 = pneg %p201
    // Predicated region
    $region9: #{vnet_forward.1} parent=5 // pred_check
      _
    $region10: #{vnet_forward.1} parent=5 // pred_check_branch
      %204 = sbr.rel (%p201) target = $region12
    $region11: #{vnet_forward.1} parent=5 // pred_region
      %s205 = ssub.s32 %s13, 1
      // Predicated region
      $region13: #{vnet_forward.1} parent=11 // pred_check
        %p206 = pneg %p60
      $region14: #{vnet_forward.1} parent=11 // pred_check_branch
        %208 = sbr.rel (%p206) target = $region16
      $region15: #{vnet_forward.1} parent=11 // pred_region
        _
      $region16: #{vnet_forward.1} parent=11 // pred_fallthru
        _
      // Predicated region
      $region17: #{vnet_forward.1} parent=11 // pred_check
        %p209 = pneg %p81
      $region18: #{vnet_forward.1} parent=11 // pred_check_branch
        %211 = sbr.rel (%p209) target = $region20
      $region19: #{vnet_forward.1} parent=11 // pred_region
        _
      $region20: #{vnet_forward.1} parent=11 // pred_fallthru
        _
      // Predicated region
      $region21: #{vnet_forward.1} parent=11 // pred_check
        %p212 = pneg %p102
      $region22: #{vnet_forward.1} parent=11 // pred_check_branch
        %214 = sbr.rel (%p212) target = $region24
      $region23: #{vnet_forward.1} parent=11 // pred_region
        _
      $region24: #{vnet_forward.1} parent=11 // pred_fallthru
        _
      // Predicated region
      $region25: #{vnet_forward.1} parent=11 // pred_check
        %p215 = pneg %p123
      $region26: #{vnet_forward.1} parent=11 // pred_check_branch
        %217 = sbr.rel (%p215) target = $region28
      $region27: #{vnet_forward.1} parent=11 // pred_region
        _
      $region28: #{vnet_forward.1} parent=11 // pred_fallthru
        _
      // Predicated region
      $region29: #{vnet_forward.1} parent=11 // pred_check
        %p218 = pneg %p144
      $region30: #{vnet_forward.1} parent=11 // pred_check_branch
        %220 = sbr.rel (%p218) target = $region32
      $region31: #{vnet_forward.1} parent=11 // pred_region
        _
      $region32: #{vnet_forward.1} parent=11 // pred_fallthru
        _
      // Predicated region
      $region33: #{vnet_forward.1} parent=11 // pred_check
        %p221 = pneg %p165
      $region34: #{vnet_forward.1} parent=11 // pred_check_branch
        %223 = sbr.rel (%p221) target = $region36
      $region35: #{vnet_forward.1} parent=11 // pred_region
        _
      $region36: #{vnet_forward.1} parent=11 // pred_fallthru
        _
    $region12: #{vnet_forward.1} parent=5 // pred_fallthru
      _
    %p224 = scmp.lt.s32.totalorder %s13, 2
    // Predicated region
    $region37: #{vnet_forward.1} parent=5 // pred_check
      %p225 = pneg %p224
    $region38: #{vnet_forward.1} parent=5 // pred_check_branch
      %227 = sbr.rel (%p225) target = $region40
    $region39: #{vnet_forward.1} parent=5 // pred_region
      // Predicated region
      $region41: #{vnet_forward.1} parent=39 // pred_check
        %p228 = pneg %p33
      $region42: #{vnet_forward.1} parent=39 // pred_check_branch
        %230 = sbr.rel (%p228) target = $region44
      $region43: #{vnet_forward.1} parent=39 // pred_region
        %s231 = smul.u32 16, %s13
        %p232 = scmp.lt.s32.totalorder %s231, 31
        %s233 = scalar_select %p232, %s231, 31
        %s234 = smul.addr %s233, 8
        %s235 = scalar_lea.vmem %s0, %s234
        %s236 = smul.u32 16, %s13
      $region44: #{vnet_forward.1} parent=39 // pred_fallthru
        _
    $region40: #{vnet_forward.1} parent=5 // pred_fallthru
      _
    %p237 = scmp.le.s32.totalorder 1, %s13
    %p238 = scmp.lt.s32.totalorder %s13, 3
    %p239 = pnand %p237, %p238
    %p240 = pneg %p239
    // Predicated region
    $region45: #{vnet_forward.1} parent=5 // pred_check
      _
    $region46: #{vnet_forward.1} parent=5 // pred_check_branch
      %242 = sbr.rel (%p239) target = $region48
    $region47: #{vnet_forward.1} parent=5 // pred_region
      %s243 = ssub.s32 %s13, 1
      %s244 = smul.u32 16, %s18
      %p245 = scmp.lt.s32.totalorder %s244, 31
      %s246 = scalar_select %p245, %s244, 31
      %s247 = smul.addr %s246, 8
      %s248 = scalar_lea.vmem %s0, %s247
      %p249 = pneg %p39
      %p250 = pneg %p36
      %p251 = pneg %p60
      %p252 = pneg %p57
      %p253 = pneg %p81
      %p254 = pneg %p78
      %p255 = pneg %p102
      %p256 = pneg %p99
      %p257 = pneg %p123
      %p258 = pneg %p120
      %p259 = pneg %p144
      %p260 = pneg %p141
      %p261 = pneg %p165
      %p262 = pneg %p162
      %p263 = pneg %p191
      %p264 = pneg %p188
      %s265 = smul.u32 16, %s18
      %p266 = scmp.lt.s32.totalorder %s265, 31
      %s267 = scalar_select %p266, %s265, 31
      %s268 = smul.addr %s267, 8
      %s269 = scalar_lea.vmem %s7, %s268
      %s270 = smul.u32 16, %s18
      %p271 = scmp.lt.s32.totalorder %s270, 31
      %s272 = scalar_select %p271, %s270, 31
      %s273 = smul.addr %s272, 8
      %s274 = scalar_lea.vmem %s0, %s273
      %s275 = smul.u32 16, %s18
      %s276 = smul.u32 16, %s18
      %p277 = scmp.lt.s32.totalorder %s276, 31
      %s278 = scalar_select %p277, %s276, 31
      %s279 = smul.addr %s278, 8
      %s280 = scalar_lea.vmem %s7, %s279
      %s281 = smul.u32 16, %s18
      %v282 = vld [vmem:[%s274] sm:$0xff]
      %v283 = vld [vmem:[%s274 + $0x8] sm:$0xff]
      %v284 = vld [vmem:[%s274 + $0x10] sm:$0xff]
      %v285 = vld [vmem:[%s274 + $0x18] sm:$0xff]
      %v286 = vld [vmem:[%s274 + $0x20] sm:$0xff]
      %v287 = vld [vmem:[%s274 + $0x28] sm:$0xff]
      %v288 = vld [vmem:[%s274 + $0x30] sm:$0xff]
      %v289 = vld [vmem:[%s274 + $0x38] sm:$0xff]
      %v290 = vld [vmem:[%s274 + $0x40] sm:$0xff]
      %v291 = vld [vmem:[%s274 + $0x48] sm:$0xff]
      %v292 = vld [vmem:[%s274 + $0x50] sm:$0xff]
      %v293 = vld [vmem:[%s274 + $0x58] sm:$0xff]
      %v294 = vld [vmem:[%s274 + $0x60] sm:$0xff]
      %v295 = vld [vmem:[%s274 + $0x68] sm:$0xff]
      %v296 = vld [vmem:[%s274 + $0x70] sm:$0xff]
      %v297 = vld [vmem:[%s274 + $0x78] sm:$0xff]
      %v298 = vld [vmem:[%s1] sm:$0xf]
      %v299 = vld [vmem:[%s2] sm:$0x1]
      %301 = vset.pattern.permute.xlu0 0
      %302 = vperm.xlu0 %301, %v282
      %v303 = vpop.permute.xlu0 %302
      %306 = vset.pattern.permute.xlu0 0
      %307 = vperm.xlu0 %306, %v283
      %v308 = vpop.permute.xlu0 %307
      %311 = vset.pattern.permute.xlu0 0
      %312 = vperm.xlu0 %311, %v284
      %v313 = vpop.permute.xlu0 %312
      %316 = vset.pattern.permute.xlu0 0
      %317 = vperm.xlu0 %316, %v285
      %v318 = vpop.permute.xlu0 %317
      %321 = vset.pattern.permute.xlu0 0
      %322 = vperm.xlu0 %321, %v286
      %v323 = vpop.permute.xlu0 %322
      %326 = vset.pattern.permute.xlu0 0
      %327 = vperm.xlu0 %326, %v287
      %v328 = vpop.permute.xlu0 %327
      %331 = vset.pattern.permute.xlu0 0
      %332 = vperm.xlu0 %331, %v288
      %v333 = vpop.permute.xlu0 %332
      %336 = vset.pattern.permute.xlu0 0
      %337 = vperm.xlu0 %336, %v289
      %v338 = vpop.permute.xlu0 %337
      %341 = vset.pattern.permute.xlu0 0
      %342 = vperm.xlu0 %341, %v290
      %v343 = vpop.permute.xlu0 %342
      %346 = vset.pattern.permute.xlu0 0
      %347 = vperm.xlu0 %346, %v291
      %v348 = vpop.permute.xlu0 %347
      %351 = vset.pattern.permute.xlu0 0
      %352 = vperm.xlu0 %351, %v292
      %v353 = vpop.permute.xlu0 %352
      %356 = vset.pattern.permute.xlu0 0
      %357 = vperm.xlu0 %356, %v293
      %v358 = vpop.permute.xlu0 %357
      %361 = vset.pattern.permute.xlu0 0
      %362 = vperm.xlu0 %361, %v294
      %v363 = vpop.permute.xlu0 %362
      %366 = vset.pattern.permute.xlu0 0
      %367 = vperm.xlu0 %366, %v295
      %v368 = vpop.permute.xlu0 %367
      %371 = vset.pattern.permute.xlu0 0
      %372 = vperm.xlu0 %371, %v296
      %v373 = vpop.permute.xlu0 %372
      %376 = vset.pattern.permute.xlu0 0
      %377 = vperm.xlu0 %376, %v297
      %v378 = vpop.permute.xlu0 %377
      %v380 = vlaneseq
      %v381 = vshrl.u32 %v380, 7
      %v382 = vsub.s32 0, %v381
      %v383 = vrot.slane %v298, %v382
      %v384 = vmul.f32 %v303, %v383
      %v385 = vmul.f32 %v308, %v383
      %v386 = vmul.f32 %v313, %v383
      %v387 = vmul.f32 %v318, %v383
      %v388 = vmul.f32 %v323, %v383
      %v389 = vmul.f32 %v328, %v383
      %v390 = vmul.f32 %v333, %v383
      %v391 = vmul.f32 %v338, %v383
      %v392 = vmul.f32 %v343, %v383
      %v393 = vmul.f32 %v348, %v383
      %v394 = vmul.f32 %v353, %v383
      %v395 = vmul.f32 %v358, %v383
      %v396 = vmul.f32 %v363, %v383
      %v397 = vmul.f32 %v368, %v383
      %v398 = vmul.f32 %v373, %v383
      %v399 = vmul.f32 %v378, %v383
      %v401 = vlaneseq
      %v402 = vshrl.u32 %v401, 7
      %v403 = vsub.s32 0, %v402
      %v404 = vrot.slane %v299, %v403
      %v406 = vadd.f32 %v404, %v384
      %v407 = vadd.f32 %v404, %v385
      %v408 = vadd.f32 %v404, %v386
      %v409 = vadd.f32 %v404, %v387
      %v410 = vadd.f32 %v404, %v388
      %v411 = vadd.f32 %v404, %v389
      %v412 = vadd.f32 %v404, %v390
      %v413 = vadd.f32 %v404, %v391
      %v414 = vadd.f32 %v404, %v392
      %v415 = vadd.f32 %v404, %v393
      %v416 = vadd.f32 %v404, %v394
      %v417 = vadd.f32 %v404, %v395
      %v418 = vadd.f32 %v404, %v396
      %v419 = vadd.f32 %v404, %v397
      %v420 = vadd.f32 %v404, %v398
      %v421 = vadd.f32 %v404, %v399
      %422 = vset.pattern.permute.xlu0 1
      %423 = vperm.xlu0 %422, %v282
      %v424 = vpop.permute.xlu0 %423
      %426 = vset.pattern.permute.xlu0 1
      %427 = vperm.xlu0 %426, %v283
      %v428 = vpop.permute.xlu0 %427
      %430 = vset.pattern.permute.xlu0 1
      %431 = vperm.xlu0 %430, %v284
      %v432 = vpop.permute.xlu0 %431
      %434 = vset.pattern.permute.xlu0 1
      %435 = vperm.xlu0 %434, %v285
      %v436 = vpop.permute.xlu0 %435
      %438 = vset.pattern.permute.xlu0 1
      %439 = vperm.xlu0 %438, %v286
      %v440 = vpop.permute.xlu0 %439
      %442 = vset.pattern.permute.xlu0 1
      %443 = vperm.xlu0 %442, %v287
      %v444 = vpop.permute.xlu0 %443
      %446 = vset.pattern.permute.xlu0 1
      %447 = vperm.xlu0 %446, %v288
      %v448 = vpop.permute.xlu0 %447
      %450 = vset.pattern.permute.xlu0 1
      %451 = vperm.xlu0 %450, %v289
      %v452 = vpop.permute.xlu0 %451
      %454 = vset.pattern.permute.xlu0 1
      %455 = vperm.xlu0 %454, %v290
      %v456 = vpop.permute.xlu0 %455
      %458 = vset.pattern.permute.xlu0 1
      %459 = vperm.xlu0 %458, %v291
      %v460 = vpop.permute.xlu0 %459
      %462 = vset.pattern.permute.xlu0 1
      %463 = vperm.xlu0 %462, %v292
      %v464 = vpop.permute.xlu0 %463
      %466 = vset.pattern.permute.xlu0 1
      %467 = vperm.xlu0 %466, %v293
      %v468 = vpop.permute.xlu0 %467
      %470 = vset.pattern.permute.xlu0 1
      %471 = vperm.xlu0 %470, %v294
      %v472 = vpop.permute.xlu0 %471
      %474 = vset.pattern.permute.xlu0 1
      %475 = vperm.xlu0 %474, %v295
      %v476 = vpop.permute.xlu0 %475
      %478 = vset.pattern.permute.xlu0 1
      %479 = vperm.xlu0 %478, %v296
      %v480 = vpop.permute.xlu0 %479
      %482 = vset.pattern.permute.xlu0 1
      %483 = vperm.xlu0 %482, %v297
      %v484 = vpop.permute.xlu0 %483
      %v486 = vlaneseq
      %v487 = vshrl.u32 %v486, 7
      %v488 = vsub.s32 1, %v487
      %v489 = vrot.slane %v298, %v488
      %v490 = vmul.f32 %v424, %v489
      %v491 = vmul.f32 %v428, %v489
      %v492 = vmul.f32 %v432, %v489
      %v493 = vmul.f32 %v436, %v489
      %v494 = vmul.f32 %v440, %v489
      %v495 = vmul.f32 %v444, %v489
      %v496 = vmul.f32 %v448, %v489
      %v497 = vmul.f32 %v452, %v489
      %v498 = vmul.f32 %v456, %v489
      %v499 = vmul.f32 %v460, %v489
      %v500 = vmul.f32 %v464, %v489
      %v501 = vmul.f32 %v468, %v489
      %v502 = vmul.f32 %v472, %v489
      %v503 = vmul.f32 %v476, %v489
      %v504 = vmul.f32 %v480, %v489
      %v505 = vmul.f32 %v484, %v489
      %v506 = vadd.f32 %v406, %v490
      %v507 = vadd.f32 %v407, %v491
      %v508 = vadd.f32 %v408, %v492
      %v509 = vadd.f32 %v409, %v493
      %v510 = vadd.f32 %v410, %v494
      %v511 = vadd.f32 %v411, %v495
      %v512 = vadd.f32 %v412, %v496
      %v513 = vadd.f32 %v413, %v497
      %v514 = vadd.f32 %v414, %v498
      %v515 = vadd.f32 %v415, %v499
      %v516 = vadd.f32 %v416, %v500
      %v517 = vadd.f32 %v417, %v501
      %v518 = vadd.f32 %v418, %v502
      %v519 = vadd.f32 %v419, %v503
      %v520 = vadd.f32 %v420, %v504
      %v521 = vadd.f32 %v421, %v505
      %522 = vset.pattern.permute.xlu0 2
      %523 = vperm.xlu0 %522, %v282
      %v524 = vpop.permute.xlu0 %523
      %526 = vset.pattern.permute.xlu0 2
      %527 = vperm.xlu0 %526, %v283
      %v528 = vpop.permute.xlu0 %527
      %530 = vset.pattern.permute.xlu0 2
      %531 = vperm.xlu0 %530, %v284
      %v532 = vpop.permute.xlu0 %531
      %534 = vset.pattern.permute.xlu0 2
      %535 = vperm.xlu0 %534, %v285
      %v536 = vpop.permute.xlu0 %535
      %538 = vset.pattern.permute.xlu0 2
      %539 = vperm.xlu0 %538, %v286
      %v540 = vpop.permute.xlu0 %539
      %542 = vset.pattern.permute.xlu0 2
      %543 = vperm.xlu0 %542, %v287
      %v544 = vpop.permute.xlu0 %543
      %546 = vset.pattern.permute.xlu0 2
      %547 = vperm.xlu0 %546, %v288
      %v548 = vpop.permute.xlu0 %547
      %550 = vset.pattern.permute.xlu0 2
      %551 = vperm.xlu0 %550, %v289
      %v552 = vpop.permute.xlu0 %551
      %554 = vset.pattern.permute.xlu0 2
      %555 = vperm.xlu0 %554, %v290
      %v556 = vpop.permute.xlu0 %555
      %558 = vset.pattern.permute.xlu0 2
      %559 = vperm.xlu0 %558, %v291
      %v560 = vpop.permute.xlu0 %559
      %562 = vset.pattern.permute.xlu0 2
      %563 = vperm.xlu0 %562, %v292
      %v564 = vpop.permute.xlu0 %563
      %566 = vset.pattern.permute.xlu0 2
      %567 = vperm.xlu0 %566, %v293
      %v568 = vpop.permute.xlu0 %567
      %570 = vset.pattern.permute.xlu0 2
      %571 = vperm.xlu0 %570, %v294
      %v572 = vpop.permute.xlu0 %571
      %574 = vset.pattern.permute.xlu0 2
      %575 = vperm.xlu0 %574, %v295
      %v576 = vpop.permute.xlu0 %575
      %578 = vset.pattern.permute.xlu0 2
      %579 = vperm.xlu0 %578, %v296
      %v580 = vpop.permute.xlu0 %579
      %582 = vset.pattern.permute.xlu0 2
      %583 = vperm.xlu0 %582, %v297
      %v584 = vpop.permute.xlu0 %583
      %v586 = vlaneseq
      %v587 = vshrl.u32 %v586, 7
      %v588 = vsub.s32 2, %v587
      %v589 = vrot.slane %v298, %v588
      %v590 = vmul.f32 %v524, %v589
      %v591 = vmul.f32 %v528, %v589
      %v592 = vmul.f32 %v532, %v589
      %v593 = vmul.f32 %v536, %v589
      %v594 = vmul.f32 %v540, %v589
      %v595 = vmul.f32 %v544, %v589
      %v596 = vmul.f32 %v548, %v589
      %v597 = vmul.f32 %v552, %v589
      %v598 = vmul.f32 %v556, %v589
      %v599 = vmul.f32 %v560, %v589
      %v600 = vmul.f32 %v564, %v589
      %v601 = vmul.f32 %v568, %v589
      %v602 = vmul.f32 %v572, %v589
      %v603 = vmul.f32 %v576, %v589
      %v604 = vmul.f32 %v580, %v589
      %v605 = vmul.f32 %v584, %v589
      %v606 = vadd.f32 %v506, %v590
      %v607 = vadd.f32 %v507, %v591
      %v608 = vadd.f32 %v508, %v592
      %v609 = vadd.f32 %v509, %v593
      %v610 = vadd.f32 %v510, %v594
      %v611 = vadd.f32 %v511, %v595
      %v612 = vadd.f32 %v512, %v596
      %v613 = vadd.f32 %v513, %v597
      %v614 = vadd.f32 %v514, %v598
      %v615 = vadd.f32 %v515, %v599
      %v616 = vadd.f32 %v516, %v600
      %v617 = vadd.f32 %v517, %v601
      %v618 = vadd.f32 %v518, %v602
      %v619 = vadd.f32 %v519, %v603
      %v620 = vadd.f32 %v520, %v604
      %v621 = vadd.f32 %v521, %v605
      %622 = vset.pattern.permute.xlu0 3
      %623 = vperm.xlu0 %622, %v282
      %v624 = vpop.permute.xlu0 %623
      %626 = vset.pattern.permute.xlu0 3
      %627 = vperm.xlu0 %626, %v283
      %v628 = vpop.permute.xlu0 %627
      %630 = vset.pattern.permute.xlu0 3
      %631 = vperm.xlu0 %630, %v284
      %v632 = vpop.permute.xlu0 %631
      %634 = vset.pattern.permute.xlu0 3
      %635 = vperm.xlu0 %634, %v285
      %v636 = vpop.permute.xlu0 %635
      %638 = vset.pattern.permute.xlu0 3
      %639 = vperm.xlu0 %638, %v286
      %v640 = vpop.permute.xlu0 %639
      %642 = vset.pattern.permute.xlu0 3
      %643 = vperm.xlu0 %642, %v287
      %v644 = vpop.permute.xlu0 %643
      %646 = vset.pattern.permute.xlu0 3
      %647 = vperm.xlu0 %646, %v288
      %v648 = vpop.permute.xlu0 %647
      %650 = vset.pattern.permute.xlu0 3
      %651 = vperm.xlu0 %650, %v289
      %v652 = vpop.permute.xlu0 %651
      %654 = vset.pattern.permute.xlu0 3
      %655 = vperm.xlu0 %654, %v290
      %v656 = vpop.permute.xlu0 %655
      %658 = vset.pattern.permute.xlu0 3
      %659 = vperm.xlu0 %658, %v291
      %v660 = vpop.permute.xlu0 %659
      %662 = vset.pattern.permute.xlu0 3
      %663 = vperm.xlu0 %662, %v292
      %v664 = vpop.permute.xlu0 %663
      %666 = vset.pattern.permute.xlu0 3
      %667 = vperm.xlu0 %666, %v293
      %v668 = vpop.permute.xlu0 %667
      %670 = vset.pattern.permute.xlu0 3
      %671 = vperm.xlu0 %670, %v294
      %v672 = vpop.permute.xlu0 %671
      %674 = vset.pattern.permute.xlu0 3
      %675 = vperm.xlu0 %674, %v295
      %v676 = vpop.permute.xlu0 %675
      %678 = vset.pattern.permute.xlu0 3
      %679 = vperm.xlu0 %678, %v296
      %v680 = vpop.permute.xlu0 %679
      %682 = vset.pattern.permute.xlu0 3
      %683 = vperm.xlu0 %682, %v297
      %v684 = vpop.permute.xlu0 %683
      %v686 = vlaneseq
      %v687 = vshrl.u32 %v686, 7
      %v688 = vsub.s32 3, %v687
      %v689 = vrot.slane %v298, %v688
      %v690 = vmul.f32 %v624, %v689
      %v691 = vmul.f32 %v628, %v689
      %v692 = vmul.f32 %v632, %v689
      %v693 = vmul.f32 %v636, %v689
      %v694 = vmul.f32 %v640, %v689
      %v695 = vmul.f32 %v644, %v689
      %v696 = vmul.f32 %v648, %v689
      %v697 = vmul.f32 %v652, %v689
      %v698 = vmul.f32 %v656, %v689
      %v699 = vmul.f32 %v660, %v689
      %v700 = vmul.f32 %v664, %v689
      %v701 = vmul.f32 %v668, %v689
      %v702 = vmul.f32 %v672, %v689
      %v703 = vmul.f32 %v676, %v689
      %v704 = vmul.f32 %v680, %v689
      %v705 = vmul.f32 %v684, %v689
      %v706 = vadd.f32 %v606, %v690
      %v707 = vadd.f32 %v607, %v691
      %v708 = vadd.f32 %v608, %v692
      %v709 = vadd.f32 %v609, %v693
      %v710 = vadd.f32 %v610, %v694
      %v711 = vadd.f32 %v611, %v695
      %v712 = vadd.f32 %v612, %v696
      %v713 = vadd.f32 %v613, %v697
      %v714 = vadd.f32 %v614, %v698
      %v715 = vadd.f32 %v615, %v699
      %v716 = vadd.f32 %v616, %v700
      %v717 = vadd.f32 %v617, %v701
      %v718 = vadd.f32 %v618, %v702
      %v719 = vadd.f32 %v619, %v703
      %v720 = vadd.f32 %v620, %v704
      %v721 = vadd.f32 %v621, %v705
      %v722 = vtanh.pop %v706
      %v723 = vtanh.pop %v707
      %v724 = vtanh.pop %v708
      %v725 = vtanh.pop %v709
      %v726 = vtanh.pop %v710
      %v727 = vtanh.pop %v711
      %v728 = vtanh.pop %v712
      %v729 = vtanh.pop %v713
      %v730 = vtanh.pop %v714
      %v731 = vtanh.pop %v715
      %v732 = vtanh.pop %v716
      %v733 = vtanh.pop %v717
      %v734 = vtanh.pop %v718
      %v735 = vtanh.pop %v719
      %v736 = vtanh.pop %v720
      %v737 = vtanh.pop %v721
      %v738 = vld [vmem:[%s3] sm:$0xff]
      %v739 = vld [vmem:[%s3 + $0x8] sm:$0xff]
      %v740 = vld [vmem:[%s3 + $0x10] sm:$0xff]
      %v741 = vld [vmem:[%s3 + $0x18] sm:$0xff]
      %v742 = vld [vmem:[%s3 + $0x20] sm:$0xff]
      %v743 = vld [vmem:[%s3 + $0x28] sm:$0xff]
      %v744 = vld [vmem:[%s3 + $0x30] sm:$0xff]
      %v745 = vld [vmem:[%s3 + $0x38] sm:$0xff]
      %v746 = vld [vmem:[%s3 + $0x40] sm:$0xff]
      %v747 = vld [vmem:[%s3 + $0x48] sm:$0xff]
      %v748 = vld [vmem:[%s3 + $0x50] sm:$0xff]
      %v749 = vld [vmem:[%s3 + $0x58] sm:$0xff]
      %v750 = vld [vmem:[%s3 + $0x60] sm:$0xff]
      %v751 = vld [vmem:[%s3 + $0x68] sm:$0xff]
      %v752 = vld [vmem:[%s3 + $0x70] sm:$0xff]
      %v753 = vld [vmem:[%s3 + $0x78] sm:$0xff]
      %v754 = vld [vmem:[%s4] sm:$0x1]
      %v756 = vlaneseq
      %v757 = vshrl.u32 %v756, 7
      %v758 = vsub.s32 0, %v757
      %v759 = vrot.slane %v754, %v758
      %761 = vmatprep.subr.mxu0 0.0
      %762 = vmatpush1.msra.mxu0 %v738
      %763 = vmatprep.subr.mxu0 0.0
      %764 = vmatpush1.msra.mxu0 %v739
      %765 = vmatprep.subr.mxu0 0.0
      %766 = vmatpush1.msra.mxu0 %v740
      %767 = vmatprep.subr.mxu0 0.0
      %768 = vmatpush1.msra.mxu0 %v741
      %769 = vmatprep.subr.mxu0 0.0
      %770 = vmatpush1.msra.mxu0 %v742
      %771 = vmatprep.subr.mxu0 0.0
      %772 = vmatpush1.msra.mxu0 %v743
      %773 = vmatprep.subr.mxu0 0.0
      %774 = vmatpush1.msra.mxu0 %v744
      %775 = vmatprep.subr.mxu0 0.0
      %776 = vmatpush1.msra.mxu0 %v745
      %777 = vmatprep.subr.mxu0 0.0
      %778 = vmatpush1.msra.mxu0 %v746
      %779 = vmatprep.subr.mxu0 0.0
      %780 = vmatpush1.msra.mxu0 %v747
      %781 = vmatprep.subr.mxu0 0.0
      %782 = vmatpush1.msra.mxu0 %v748
      %783 = vmatprep.subr.mxu0 0.0
      %784 = vmatpush1.msra.mxu0 %v749
      %785 = vmatprep.subr.mxu0 0.0
      %786 = vmatpush1.msra.mxu0 %v750
      %787 = vmatprep.subr.mxu0 0.0
      %788 = vmatpush1.msra.mxu0 %v751
      %789 = vmatprep.subr.mxu0 0.0
      %790 = vmatpush1.msra.mxu0 %v752
      %791 = vmatprep.subr.mxu0 0.0
      %792 = vmatpush1.msra.mxu0 %v753
      %793 = vmatprep.subr.mxu0 0.0
      %794 = vmatpush1.msra.mxu0 0.0
      %795 = vmatprep.subr.mxu0 0.0
      %796 = vmatpush1.msra.mxu0 0.0
      %797 = vmatprep.subr.mxu0 0.0
      %798 = vmatpush1.msra.mxu0 0.0
      %799 = vmatprep.subr.mxu0 0.0
      %800 = vmatpush1.msra.mxu0 0.0
      %801 = vmatprep.subr.mxu0 0.0
      %802 = vmatpush1.msra.mxu0 0.0
      %803 = vmatprep.subr.mxu0 0.0
      %804 = vmatpush1.msra.mxu0 0.0
      %805 = vmatprep.subr.mxu0 0.0
      %806 = vmatpush1.msra.mxu0 0.0
      %807 = vmatprep.subr.mxu0 0.0
      %808 = vmatpush1.msra.mxu0 0.0
      %809 = vmatprep.subr.mxu0 0.0
      %810 = vmatpush1.msra.mxu0 0.0
      %811 = vmatprep.subr.mxu0 0.0
      %812 = vmatpush1.msra.mxu0 0.0
      %813 = vmatprep.subr.mxu0 0.0
      %814 = vmatpush1.msra.mxu0 0.0
      %815 = vmatprep.subr.mxu0 0.0
      %816 = vmatpush1.msra.mxu0 0.0
      %817 = vmatprep.subr.mxu0 0.0
      %818 = vmatpush1.msra.mxu0 0.0
      %819 = vmatprep.subr.mxu0 0.0
      %820 = vmatpush1.msra.mxu0 0.0
      %821 = vmatprep.subr.mxu0 0.0
      %822 = vmatpush1.msra.mxu0 0.0
      %823 = vmatprep.subr.mxu0 0.0
      %824 = vmatpush1.msra.mxu0 0.0
      %825 = vmatprep.mubr.f32.mxu0 0.0
      %826 = vmatmul.mubr.f32.gmra.mrb[0].mxu0 %v722
      %v827 = vpop.f32.mrb[0].mxu0
      %v828 = vadd.f32 %v759, %v827
      %v829 = vpop.f32.mrb[0].mxu0
      %830 = vmatprep.mubr.f32.mxu0 0.0
      %831 = vmatmul.mubr.f32.gmra.mrb[0].mxu0 %v723
      %v832 = vpop.f32.mrb[0].mxu0
      %v833 = vadd.f32 %v759, %v832
      %v834 = vpop.f32.mrb[0].mxu0
      %835 = vmatprep.mubr.f32.mxu0 0.0
      %836 = vmatmul.mubr.f32.gmra.mrb[0].mxu0 %v724
      %v837 = vpop.f32.mrb[0].mxu0
      %v838 = vadd.f32 %v759, %v837
      %v839 = vpop.f32.mrb[0].mxu0
      %840 = vmatprep.mubr.f32.mxu0 0.0
      %841 = vmatmul.mubr.f32.gmra.mrb[0].mxu0 %v725
      %v842 = vpop.f32.mrb[0].mxu0
      %v843 = vadd.f32 %v759, %v842
      %v844 = vpop.f32.mrb[0].mxu0
      %845 = vmatprep.mubr.f32.mxu0 0.0
      %846 = vmatmul.mubr.f32.gmra.mrb[0].mxu0 %v726
      %v847 = vpop.f32.mrb[0].mxu0
      %v848 = vadd.f32 %v759, %v847
      %v849 = vpop.f32.mrb[0].mxu0
      %850 = vmatprep.mubr.f32.mxu0 0.0
      %851 = vmatmul.mubr.f32.gmra.mrb[0].mxu0 %v727
      %v852 = vpop.f32.mrb[0].mxu0
      %v853 = vadd.f32 %v759, %v852
      %v854 = vpop.f32.mrb[0].mxu0
      %855 = vmatprep.mubr.f32.mxu0 0.0
      %856 = vmatmul.mubr.f32.gmra.mrb[0].mxu0 %v728
      %v857 = vpop.f32.mrb[0].mxu0
      %v858 = vadd.f32 %v759, %v857
      %v859 = vpop.f32.mrb[0].mxu0
      %860 = vmatprep.mubr.f32.mxu0 0.0
      %861 = vmatmul.mubr.f32.gmra.mrb[0].mxu0 %v729
      %v862 = vpop.f32.mrb[0].mxu0
      %v863 = vadd.f32 %v759, %v862
      %v864 = vpop.f32.mrb[0].mxu0
      %865 = vmatprep.mubr.f32.mxu0 0.0
      %866 = vmatmul.mubr.f32.gmra.mrb[0].mxu0 %v730
      %v867 = vpop.f32.mrb[0].mxu0
      %v868 = vadd.f32 %v759, %v867
      %v869 = vpop.f32.mrb[0].mxu0
      %870 = vmatprep.mubr.f32.mxu0 0.0
      %871 = vmatmul.mubr.f32.gmra.mrb[0].mxu0 %v731
      %v872 = vpop.f32.mrb[0].mxu0
      %v873 = vadd.f32 %v759, %v872
      %v874 = vpop.f32.mrb[0].mxu0
      %875 = vmatprep.mubr.f32.mxu0 0.0
      %876 = vmatmul.mubr.f32.gmra.mrb[0].mxu0 %v732
      %v877 = vpop.f32.mrb[0].mxu0
      %v878 = vadd.f32 %v759, %v877
      %v879 = vpop.f32.mrb[0].mxu0
      %880 = vmatprep.mubr.f32.mxu0 0.0
      %881 = vmatmul.mubr.f32.gmra.mrb[0].mxu0 %v733
      %v882 = vpop.f32.mrb[0].mxu0
      %v883 = vadd.f32 %v759, %v882
      %v884 = vpop.f32.mrb[0].mxu0
      %885 = vmatprep.mubr.f32.mxu0 0.0
      %886 = vmatmul.mubr.f32.gmra.mrb[0].mxu0 %v734
      %v887 = vpop.f32.mrb[0].mxu0
      %v888 = vadd.f32 %v759, %v887
      %v889 = vpop.f32.mrb[0].mxu0
      %890 = vmatprep.mubr.f32.mxu0 0.0
      %891 = vmatmul.mubr.f32.gmra.mrb[0].mxu0 %v735
      %v892 = vpop.f32.mrb[0].mxu0
      %v893 = vadd.f32 %v759, %v892
      %v894 = vpop.f32.mrb[0].mxu0
      %895 = vmatprep.mubr.f32.mxu0 0.0
      %896 = vmatmul.mubr.f32.gmra.mrb[0].mxu0 %v736
      %v897 = vpop.f32.mrb[0].mxu0
      %v898 = vadd.f32 %v759, %v897
      %v899 = vpop.f32.mrb[0].mxu0
      %900 = vmatprep.mubr.f32.mxu0 0.0
      %901 = vmatmul.mubr.f32.gmra.mrb[0].mxu0 %v737
      %v902 = vpop.f32.mrb[0].mxu0
      %v903 = vadd.f32 %v759, %v902
      %v904 = vpop.f32.mrb[0].mxu0
      %905 = vdwg.mxu0
      %v906 = vtanh.pop %v828
      %v907 = vtanh.pop %v833
      %v908 = vtanh.pop %v838
      %v909 = vtanh.pop %v843
      %v910 = vtanh.pop %v848
      %v911 = vtanh.pop %v853
      %v912 = vtanh.pop %v858
      %v913 = vtanh.pop %v863
      %v914 = vtanh.pop %v868
      %v915 = vtanh.pop %v873
      %v916 = vtanh.pop %v878
      %v917 = vtanh.pop %v883
      %v918 = vtanh.pop %v888
      %v919 = vtanh.pop %v893
      %v920 = vtanh.pop %v898
      %v921 = vtanh.pop %v903
      %v922 = vld [vmem:[%s5] sm:$0xff]
      %v923 = vld [vmem:[%s5 + $0x8] sm:$0xff]
      %v924 = vld [vmem:[%s5 + $0x10] sm:$0xff]
      %v925 = vld [vmem:[%s5 + $0x18] sm:$0xff]
      %v926 = vld [vmem:[%s5 + $0x20] sm:$0xff]
      %v927 = vld [vmem:[%s5 + $0x28] sm:$0xff]
      %v928 = vld [vmem:[%s5 + $0x30] sm:$0xff]
      %v929 = vld [vmem:[%s5 + $0x38] sm:$0xff]
      %v930 = vld [vmem:[%s5 + $0x40] sm:$0xff]
      %v931 = vld [vmem:[%s5 + $0x48] sm:$0xff]
      %v932 = vld [vmem:[%s5 + $0x50] sm:$0xff]
      %v933 = vld [vmem:[%s5 + $0x58] sm:$0xff]
      %v934 = vld [vmem:[%s5 + $0x60] sm:$0xff]
      %v935 = vld [vmem:[%s5 + $0x68] sm:$0xff]
      %v936 = vld [vmem:[%s5 + $0x70] sm:$0xff]
      %v937 = vld [vmem:[%s5 + $0x78] sm:$0xff]
      %v938 = vld [vmem:[%s6] sm:$0x1]
      %v940 = vlaneseq
      %v941 = vshrl.u32 %v940, 7
      %v942 = vsub.s32 0, %v941
      %v943 = vrot.slane %v938, %v942
      %945 = vmatprep.subr.mxu0 0.0
      %946 = vmatpush1.msra.mxu0 %v922
      %947 = vmatprep.subr.mxu0 0.0
      %948 = vmatpush1.msra.mxu0 %v923
      %949 = vmatprep.subr.mxu0 0.0
      %950 = vmatpush1.msra.mxu0 %v924
      %951 = vmatprep.subr.mxu0 0.0
      %952 = vmatpush1.msra.mxu0 %v925
      %953 = vmatprep.subr.mxu0 0.0
      %954 = vmatpush1.msra.mxu0 %v926
      %955 = vmatprep.subr.mxu0 0.0
      %956 = vmatpush1.msra.mxu0 %v927
      %957 = vmatprep.subr.mxu0 0.0
      %958 = vmatpush1.msra.mxu0 %v928
      %959 = vmatprep.subr.mxu0 0.0
      %960 = vmatpush1.msra.mxu0 %v929
      %961 = vmatprep.subr.mxu0 0.0
      %962 = vmatpush1.msra.mxu0 %v930
      %963 = vmatprep.subr.mxu0 0.0
      %964 = vmatpush1.msra.mxu0 %v931
      %965 = vmatprep.subr.mxu0 0.0
      %966 = vmatpush1.msra.mxu0 %v932
      %967 = vmatprep.subr.mxu0 0.0
      %968 = vmatpush1.msra.mxu0 %v933
      %969 = vmatprep.subr.mxu0 0.0
      %970 = vmatpush1.msra.mxu0 %v934
      %971 = vmatprep.subr.mxu0 0.0
      %972 = vmatpush1.msra.mxu0 %v935
      %973 = vmatprep.subr.mxu0 0.0
      %974 = vmatpush1.msra.mxu0 %v936
      %975 = vmatprep.subr.mxu0 0.0
      %976 = vmatpush1.msra.mxu0 %v937
      %977 = vmatprep.subr.mxu0 0.0
      %978 = vmatpush1.msra.mxu0 0.0
      %979 = vmatprep.subr.mxu0 0.0
      %980 = vmatpush1.msra.mxu0 0.0
      %981 = vmatprep.subr.mxu0 0.0
      %982 = vmatpush1.msra.mxu0 0.0
      %983 = vmatprep.subr.mxu0 0.0
      %984 = vmatpush1.msra.mxu0 0.0
      %985 = vmatprep.subr.mxu0 0.0
      %986 = vmatpush1.msra.mxu0 0.0
      %987 = vmatprep.subr.mxu0 0.0
      %988 = vmatpush1.msra.mxu0 0.0
      %989 = vmatprep.subr.mxu0 0.0
      %990 = vmatpush1.msra.mxu0 0.0
      %991 = vmatprep.subr.mxu0 0.0
      %992 = vmatpush1.msra.mxu0 0.0
      %993 = vmatprep.subr.mxu0 0.0
      %994 = vmatpush1.msra.mxu0 0.0
      %995 = vmatprep.subr.mxu0 0.0
      %996 = vmatpush1.msra.mxu0 0.0
      %997 = vmatprep.subr.mxu0 0.0
      %998 = vmatpush1.msra.mxu0 0.0
      %999 = vmatprep.subr.mxu0 0.0
      %1000 = vmatpush1.msra.mxu0 0.0
      %1001 = vmatprep.subr.mxu0 0.0
      %1002 = vmatpush1.msra.mxu0 0.0
      %1003 = vmatprep.subr.mxu0 0.0
      %1004 = vmatpush1.msra.mxu0 0.0
      %1005 = vmatprep.subr.mxu0 0.0
      %1006 = vmatpush1.msra.mxu0 0.0
      %1007 = vmatprep.subr.mxu0 0.0
      %1008 = vmatpush1.msra.mxu0 0.0
      %1009 = vmatprep.mubr.f32.mxu0 0.0
      %1010 = vmatmul.mubr.f32.gmra.mrb[0].mxu0 %v906
      %v1011 = vpop.f32.mrb[0].mxu0
      %v1012 = vadd.f32 %v943, %v1011
      %v1013 = vpop.f32.mrb[0].mxu0
      %1014 = vmatprep.mubr.f32.mxu0 0.0
      %1015 = vmatmul.mubr.f32.gmra.mrb[0].mxu0 %v907
      %v1016 = vpop.f32.mrb[0].mxu0
      %v1017 = vadd.f32 %v943, %v1016
      %v1018 = vpop.f32.mrb[0].mxu0
      %1019 = vmatprep.mubr.f32.mxu0 0.0
      %1020 = vmatmul.mubr.f32.gmra.mrb[0].mxu0 %v908
      %v1021 = vpop.f32.mrb[0].mxu0
      %v1022 = vadd.f32 %v943, %v1021
      %v1023 = vpop.f32.mrb[0].mxu0
      %1024 = vmatprep.mubr.f32.mxu0 0.0
      %1025 = vmatmul.mubr.f32.gmra.mrb[0].mxu0 %v909
      %v1026 = vpop.f32.mrb[0].mxu0
      %v1027 = vadd.f32 %v943, %v1026
      %v1028 = vpop.f32.mrb[0].mxu0
      %1029 = vmatprep.mubr.f32.mxu0 0.0
      %1030 = vmatmul.mubr.f32.gmra.mrb[0].mxu0 %v910
      %v1031 = vpop.f32.mrb[0].mxu0
      %v1032 = vadd.f32 %v943, %v1031
      %v1033 = vpop.f32.mrb[0].mxu0
      %1034 = vmatprep.mubr.f32.mxu0 0.0
      %1035 = vmatmul.mubr.f32.gmra.mrb[0].mxu0 %v911
      %v1036 = vpop.f32.mrb[0].mxu0
      %v1037 = vadd.f32 %v943, %v1036
      %v1038 = vpop.f32.mrb[0].mxu0
      %1039 = vmatprep.mubr.f32.mxu0 0.0
      %1040 = vmatmul.mubr.f32.gmra.mrb[0].mxu0 %v912
      %v1041 = vpop.f32.mrb[0].mxu0
      %v1042 = vadd.f32 %v943, %v1041
      %v1043 = vpop.f32.mrb[0].mxu0
      %1044 = vmatprep.mubr.f32.mxu0 0.0
      %1045 = vmatmul.mubr.f32.gmra.mrb[0].mxu0 %v913
      %v1046 = vpop.f32.mrb[0].mxu0
      %v1047 = vadd.f32 %v943, %v1046
      %v1048 = vpop.f32.mrb[0].mxu0
      %1049 = vmatprep.mubr.f32.mxu0 0.0
      %1050 = vmatmul.mubr.f32.gmra.mrb[0].mxu0 %v914
      %v1051 = vpop.f32.mrb[0].mxu0
      %v1052 = vadd.f32 %v943, %v1051
      %v1053 = vpop.f32.mrb[0].mxu0
      %1054 = vmatprep.mubr.f32.mxu0 0.0
      %1055 = vmatmul.mubr.f32.gmra.mrb[0].mxu0 %v915
      %v1056 = vpop.f32.mrb[0].mxu0
      %v1057 = vadd.f32 %v943, %v1056
      %v1058 = vpop.f32.mrb[0].mxu0
      %1059 = vmatprep.mubr.f32.mxu0 0.0
      %1060 = vmatmul.mubr.f32.gmra.mrb[0].mxu0 %v916
      %v1061 = vpop.f32.mrb[0].mxu0
      %v1062 = vadd.f32 %v943, %v1061
      %v1063 = vpop.f32.mrb[0].mxu0
      %1064 = vmatprep.mubr.f32.mxu0 0.0
      %1065 = vmatmul.mubr.f32.gmra.mrb[0].mxu0 %v917
      %v1066 = vpop.f32.mrb[0].mxu0
      %v1067 = vadd.f32 %v943, %v1066
      %v1068 = vpop.f32.mrb[0].mxu0
      %1069 = vmatprep.mubr.f32.mxu0 0.0
      %1070 = vmatmul.mubr.f32.gmra.mrb[0].mxu0 %v918
      %v1071 = vpop.f32.mrb[0].mxu0
      %v1072 = vadd.f32 %v943, %v1071
      %v1073 = vpop.f32.mrb[0].mxu0
      %1074 = vmatprep.mubr.f32.mxu0 0.0
      %1075 = vmatmul.mubr.f32.gmra.mrb[0].mxu0 %v919
      %v1076 = vpop.f32.mrb[0].mxu0
      %v1077 = vadd.f32 %v943, %v1076
      %v1078 = vpop.f32.mrb[0].mxu0
      %1079 = vmatprep.mubr.f32.mxu0 0.0
      %1080 = vmatmul.mubr.f32.gmra.mrb[0].mxu0 %v920
      %v1081 = vpop.f32.mrb[0].mxu0
      %v1082 = vadd.f32 %v943, %v1081
      %v1083 = vpop.f32.mrb[0].mxu0
      %1084 = vmatprep.mubr.f32.mxu0 0.0
      %1085 = vmatmul.mubr.f32.gmra.mrb[0].mxu0 %v921
      %v1086 = vpop.f32.mrb[0].mxu0
      %v1087 = vadd.f32 %v943, %v1086
      %v1088 = vpop.f32.mrb[0].mxu0
      %1089 = vdwg.mxu0
      %v1090 = vxor.u32 %v1012, 2147483648
      %v1091 = vxor.u32 %v1017, 2147483648
      %v1092 = vxor.u32 %v1022, 2147483648
      %v1093 = vxor.u32 %v1027, 2147483648
      %v1094 = vxor.u32 %v1032, 2147483648
      %v1095 = vxor.u32 %v1037, 2147483648
      %v1096 = vxor.u32 %v1042, 2147483648
      %v1097 = vxor.u32 %v1047, 2147483648
      %v1098 = vxor.u32 %v1052, 2147483648
      %v1099 = vxor.u32 %v1057, 2147483648
      %v1100 = vxor.u32 %v1062, 2147483648
      %v1101 = vxor.u32 %v1067, 2147483648
      %v1102 = vxor.u32 %v1072, 2147483648
      %v1103 = vxor.u32 %v1077, 2147483648
      %v1104 = vxor.u32 %v1082, 2147483648
      %v1105 = vxor.u32 %v1087, 2147483648
      %v1106 = vmul.f32 %v1090, 1.442695
      %v1107 = vpow.pop %v1106
      %v1108 = vmul.f32 %v1091, 1.442695
      %v1109 = vpow.pop %v1108
      %v1110 = vmul.f32 %v1092, 1.442695
      %v1111 = vpow.pop %v1110
      %v1112 = vmul.f32 %v1093, 1.442695
      %v1113 = vpow.pop %v1112
      %v1114 = vmul.f32 %v1094, 1.442695
      %v1115 = vpow.pop %v1114
      %v1116 = vmul.f32 %v1095, 1.442695
      %v1117 = vpow.pop %v1116
      %v1118 = vmul.f32 %v1096, 1.442695
      %v1119 = vpow.pop %v1118
      %v1120 = vmul.f32 %v1097, 1.442695
      %v1121 = vpow.pop %v1120
      %v1122 = vmul.f32 %v1098, 1.442695
      %v1123 = vpow.pop %v1122
      %v1124 = vmul.f32 %v1099, 1.442695
      %v1125 = vpow.pop %v1124
      %v1126 = vmul.f32 %v1100, 1.442695
      %v1127 = vpow.pop %v1126
      %v1128 = vmul.f32 %v1101, 1.442695
      %v1129 = vpow.pop %v1128
      %v1130 = vmul.f32 %v1102, 1.442695
      %v1131 = vpow.pop %v1130
      %v1132 = vmul.f32 %v1103, 1.442695
      %v1133 = vpow.pop %v1132
      %v1134 = vmul.f32 %v1104, 1.442695
      %v1135 = vpow.pop %v1134
      %v1136 = vmul.f32 %v1105, 1.442695
      %v1137 = vpow.pop %v1136
      %v1138 = vadd.f32 %v1107, 1.0
      %v1139 = vadd.f32 %v1109, 1.0
      %v1140 = vadd.f32 %v1111, 1.0
      %v1141 = vadd.f32 %v1113, 1.0
      %v1142 = vadd.f32 %v1115, 1.0
      %v1143 = vadd.f32 %v1117, 1.0
      %v1144 = vadd.f32 %v1119, 1.0
      %v1145 = vadd.f32 %v1121, 1.0
      %v1146 = vadd.f32 %v1123, 1.0
      %v1147 = vadd.f32 %v1125, 1.0
      %v1148 = vadd.f32 %v1127, 1.0
      %v1149 = vadd.f32 %v1129, 1.0
      %v1150 = vadd.f32 %v1131, 1.0
      %v1151 = vadd.f32 %v1133, 1.0
      %v1152 = vadd.f32 %v1135, 1.0
      %v1153 = vadd.f32 %v1137, 1.0
      %v1154 = vrcp.pop %v1138
      %v1155 = vmul.f32 1.0, %v1154
      %v1156 = vrcp.pop %v1139
      %v1157 = vmul.f32 1.0, %v1156
      %v1158 = vrcp.pop %v1140
      %v1159 = vmul.f32 1.0, %v1158
      %v1160 = vrcp.pop %v1141
      %v1161 = vmul.f32 1.0, %v1160
      %v1162 = vrcp.pop %v1142
      %v1163 = vmul.f32 1.0, %v1162
      %v1164 = vrcp.pop %v1143
      %v1165 = vmul.f32 1.0, %v1164
      %v1166 = vrcp.pop %v1144
      %v1167 = vmul.f32 1.0, %v1166
      %v1168 = vrcp.pop %v1145
      %v1169 = vmul.f32 1.0, %v1168
      %v1170 = vrcp.pop %v1146
      %v1171 = vmul.f32 1.0, %v1170
      %v1172 = vrcp.pop %v1147
      %v1173 = vmul.f32 1.0, %v1172
      %v1174 = vrcp.pop %v1148
      %v1175 = vmul.f32 1.0, %v1174
      %v1176 = vrcp.pop %v1149
      %v1177 = vmul.f32 1.0, %v1176
      %v1178 = vrcp.pop %v1150
      %v1179 = vmul.f32 1.0, %v1178
      %v1180 = vrcp.pop %v1151
      %v1181 = vmul.f32 1.0, %v1180
      %v1182 = vrcp.pop %v1152
      %v1183 = vmul.f32 1.0, %v1182
      %v1184 = vrcp.pop %v1153
      %v1185 = vmul.f32 1.0, %v1184
      %vm1186 = vcmask 15360
      %1187 = vst.msk [vmem:[%s280] sm:$0xff] %vm1186, %v1155
      %1188 = vst.msk [vmem:[%s280 + $0x8] sm:$0xff] %vm1186, %v1157
      %1189 = vst.msk [vmem:[%s280 + $0x10] sm:$0xff] %vm1186, %v1159
      %1190 = vst.msk [vmem:[%s280 + $0x18] sm:$0xff] %vm1186, %v1161
      %1191 = vst.msk [vmem:[%s280 + $0x20] sm:$0xff] %vm1186, %v1163
      %1192 = vst.msk [vmem:[%s280 + $0x28] sm:$0xff] %vm1186, %v1165
      %1193 = vst.msk [vmem:[%s280 + $0x30] sm:$0xff] %vm1186, %v1167
      %1194 = vst.msk [vmem:[%s280 + $0x38] sm:$0xff] %vm1186, %v1169
      %1195 = vst.msk [vmem:[%s280 + $0x40] sm:$0xff] %vm1186, %v1171
      %1196 = vst.msk [vmem:[%s280 + $0x48] sm:$0xff] %vm1186, %v1173
      %1197 = vst.msk [vmem:[%s280 + $0x50] sm:$0xff] %vm1186, %v1175
      %1198 = vst.msk [vmem:[%s280 + $0x58] sm:$0xff] %vm1186, %v1177
      %1199 = vst.msk [vmem:[%s280 + $0x60] sm:$0xff] %vm1186, %v1179
      %1200 = vst.msk [vmem:[%s280 + $0x68] sm:$0xff] %vm1186, %v1181
      %1201 = vst.msk [vmem:[%s280 + $0x70] sm:$0xff] %vm1186, %v1183
      %1202 = vst.msk [vmem:[%s280 + $0x78] sm:$0xff] %vm1186, %v1185
      %s1203 = smul.u32 16, %s18
      %p1204 = scmp.lt.s32.totalorder %s1203, 31
      %s1205 = scalar_select %p1204, %s1203, 31
      %s1206 = smul.addr %s1205, 8
      %s1207 = scalar_lea.vmem %s7, %s1206
      // Predicated region
      $region49: #{vnet_forward.1} parent=47 // pred_check
        %p1208 = pneg %p188
      $region50: #{vnet_forward.1} parent=47 // pred_check_branch
        %1210 = sbr.rel (%p1208) target = $region52
      $region51: #{vnet_forward.1} parent=47 // pred_region
        %s1211 = smul.u32 16, %s18
      $region52: #{vnet_forward.1} parent=47 // pred_fallthru
        _
    $region48: #{vnet_forward.1} parent=5 // pred_fallthru
      _
    %p1212 = scmp.le.s32.totalorder 2, %s13
    // Predicated region
    $region53: #{vnet_forward.1} parent=5 // pred_check
      %p1213 = pneg %p1212
    $region54: #{vnet_forward.1} parent=5 // pred_check_branch
      %1215 = sbr.rel (%p1213) target = $region56
    $region55: #{vnet_forward.1} parent=5 // pred_region
      %s1216 = ssub.s32 %s13, 2
      // Predicated region
      $region57: #{vnet_forward.1} parent=55 // pred_check
        %p1217 = pneg %p194
      $region58: #{vnet_forward.1} parent=55 // pred_check_branch
        %1219 = sbr.rel (%p1217) target = $region60
      $region59: #{vnet_forward.1} parent=55 // pred_region
        %s1220 = smul.u32 16, %s19
        %p1221 = scmp.lt.s32.totalorder %s1220, 31
        %s1222 = scalar_select %p1221, %s1220, 31
        %s1223 = smul.addr %s1222, 8
        %s1224 = scalar_lea.vmem %s7, %s1223
      $region60: #{vnet_forward.1} parent=55 // pred_fallthru
        _
    $region56: #{vnet_forward.1} parent=5 // pred_fallthru
      _
  $region6: #{vnet_forward.1} parent=0 // loop_footer
    %s17 = sadd.s32 1, %s13
  $region7: #{vnet_forward.1} parent=0 // loop_footer_branch
    %12 = sbr.rel target = $region3
  $region8: #{vnet_forward.1} parent=0 // loop_exit
    _

</llo_original>
